<compile_context>
chip_gen: v5e
topology: v5e:2x2
jax: 0.10.0
libtpu: 0.0.40
codegen_flags: <defaults>
</compile_context>

<pallas_src>
import jax
import jax.numpy as jnp
from jax.experimental import pallas as pl
from jax.experimental.pallas import tpu as pltpu


_VMEM_BUDGET_BYTES = 40 * 1024 * 1024   # conservative: fits v7x (64 MiB) too
_VMEM_LIMIT_CAP = 48 * 1024 * 1024


def _pick_class_block(n_cls, requested, bytes_per_class):
    """Largest class block that divides n_cls and fits the VMEM budget
    (double-buffered)."""
    cb = n_cls if requested is None else max(1, min(requested, n_cls))
    while cb > 1 and (n_cls % cb != 0
                      or 2 * cb * bytes_per_class > _VMEM_BUDGET_BYTES):
        cb -= 1
    return cb


# --------------------- concat-style forward (safe path) ---------------------

def _make_concat_kernel(generic_ctx: bool):
    def kernel(prefix_ref, ctx_ref, suffix_ref, out_ref):
        # prefix_ref : (CB, 1, D)
        # ctx_ref    : (n_ctx, D) generic   or (CB, n_ctx, D) class-specific
        # suffix_ref : (CB, Ls, D)
        # out_ref    : (CB, S, D)
        cb = out_ref.shape[0]
        ctx = ctx_ref[...].astype(out_ref.dtype)          # fp32 param -> prompt dtype
        if generic_ctx:
            ctx = jnp.broadcast_to(ctx[None], (cb,) + ctx.shape)
        # Single full-tile store (replaces three misaligned sub-stores).
        out_ref[...] = jnp.concatenate(
            [prefix_ref[...], ctx, suffix_ref[...]], axis=1)
    return kernel


def prompt_learner_forward(token_prefix, ctx, token_suffix, *, class_block=None):
    """CoOp PromptLearner.forward() for class_token_position == 'end'.

    token_prefix : (n_cls, 1, D)
    ctx          : (n_ctx, D) generic or (n_cls, n_ctx, D) class-specific
    token_suffix : (n_cls, Ls, D)
    returns      : (n_cls, 1 + n_ctx + Ls, D) in the token-embedding dtype
    """
    n_cls, _, d = token_prefix.shape
    generic = ctx.ndim == 2
    n_ctx = ctx.shape[-2]
    ls = token_suffix.shape[1]
    seq = 1 + n_ctx + ls
    out_dtype = token_prefix.dtype
    out_isz = jnp.dtype(out_dtype).itemsize
    ctx_isz = jnp.dtype(ctx.dtype).itemsize

    # VMEM per class per buffered copy: prefix + suffix + out tiles (+ csc ctx).
    per_class = d * out_isz * (1 + ls + seq) + (0 if generic else n_ctx * d * ctx_isz)
    cb = _pick_class_block(n_cls, class_block, per_class)
    grid = (n_cls // cb,)

    if generic:
        # constant index_map -> the ctx block is DMA'd once and reused
        ctx_spec = pl.BlockSpec((n_ctx, d), lambda i: (0, 0))
    else:
        ctx_spec = pl.BlockSpec((cb, n_ctx, d), lambda i: (i, 0, 0))

    vmem_limit = int(min(max(2 * cb * per_class + 2 * n_ctx * d * ctx_isz + (1 << 20),
                             8 << 20),
                         _VMEM_LIMIT_CAP))

    return pl.pallas_call(
        _make_concat_kernel(generic),
        out_shape=jax.ShapeDtypeStruct((n_cls, seq, d), out_dtype),
        grid=grid,
        in_specs=[
            pl.BlockSpec((cb, 1, d), lambda i: (i, 0, 0)),     # prefix
            ctx_spec,                                          # ctx
            pl.BlockSpec((cb, ls, d), lambda i: (i, 0, 0)),    # suffix
        ],
        out_specs=pl.BlockSpec((cb, seq, d), lambda i: (i, 0, 0)),
        compiler_params=pltpu.CompilerParams(
            dimension_semantics=("parallel",),   # v7x: 2 TCs shard class blocks
            vmem_limit_bytes=vmem_limit,
        ),
    )(token_prefix, ctx, token_suffix)


# --------------- aliased in-place forward (ctx rows only written) ------------

def _make_inplace_kernel(n_ctx: int, cb: int, generic_ctx: bool):
    def kernel(base_hbm_ref, ctx_ref, out_hbm_ref, ctx_vmem, sem):
        # base_hbm_ref : (n_cls, S, D) HBM, aliased with out_hbm_ref; its
        #                prefix/suffix rows are already correct -> never touched.
        # ctx_ref      : (n_ctx, D) or (CB, n_ctx, D) in VMEM
        # out_hbm_ref  : (n_cls, S, D) HBM (same buffer as base_hbm_ref)
        # ctx_vmem     : (CB, n_ctx, D) VMEM staging tile
        # sem          : DMA semaphore
        del base_hbm_ref
        i = pl.program_id(0)
        ctx = ctx_ref[...].astype(ctx_vmem.dtype)
        if generic_ctx:
            ctx = jnp.broadcast_to(ctx[None], ctx_vmem.shape)
        ctx_vmem[...] = ctx
        cp = pltpu.make_async_copy(
            ctx_vmem,
            out_hbm_ref.at[pl.ds(i * cb, cb), pl.ds(1, n_ctx), :],
            sem,
        )
        cp.start()
        cp.wait()
    return kernel


def prompt_learner_forward_inplace(prompt_base, ctx, *, class_block=None):
    """Same result as prompt_learner_forward, but takes the full token
    embedding (n_cls, S, D) (which already contains the prefix/suffix rows,
    exactly as produced in __init__) and only writes the n_ctx context rows.
    """
    n_cls, seq, d = prompt_base.shape
    generic = ctx.ndim == 2
    n_ctx = ctx.shape[-2]
    out_dtype = prompt_base.dtype
    per_class = n_ctx * d * (jnp.dtype(out_dtype).itemsize
                             + (0 if generic else jnp.dtype(ctx.dtype).itemsize))
    cb = _pick_class_block(n_cls, class_block, per_class)
    grid = (n_cls // cb,)

    if generic:
        ctx_spec = pl.BlockSpec((n_ctx, d), lambda i: (0, 0))
    else:
        ctx_spec = pl.BlockSpec((cb, n_ctx, d), lambda i: (i, 0, 0))

    vmem_limit = int(min(max(4 * cb * per_class + (1 << 20), 8 << 20),
                         _VMEM_LIMIT_CAP))

    return pl.pallas_call(
        _make_inplace_kernel(n_ctx, cb, generic),
        out_shape=jax.ShapeDtypeStruct((n_cls, seq, d), out_dtype),
        grid=grid,
        in_specs=[
            pl.BlockSpec(memory_space=pl.ANY),   # full prompt buffer (aliased)
            ctx_spec,
        ],
        out_specs=pl.BlockSpec(memory_space=pl.ANY),
        scratch_shapes=[
            pltpu.VMEM((cb, n_ctx, d), out_dtype),
            pltpu.SemaphoreType.DMA(()),
        ],
        input_output_aliases={0: 0},
        compiler_params=pltpu.CompilerParams(
            dimension_semantics=("arbitrary",),
            vmem_limit_bytes=vmem_limit,
        ),
    )(prompt_base, ctx)


if __name__ == "__main__":
    # Small deterministic setup consistent with __init__:
    n_cls, n_ctx, ctx_dim, seq_len = 8, 4, 128, 16
    suffix_len = seq_len - 1 - n_ctx  # 11

    key = jax.random.PRNGKey(0)
    k_emb, k_ctx, k_csc = jax.random.split(key, 3)

    # stand-in for token_embedding(tokenized_prompts); prefix/suffix are the
    # same slices __init__ registers as buffers.
    embedding = jax.random.normal(k_emb, (n_cls, seq_len, ctx_dim), dtype=jnp.float32)
    token_prefix = embedding[:, :1, :]
    token_suffix = embedding[:, 1 + n_ctx:, :]

    # generic context parameter: nn.init.normal_(std=0.02)
    ctx = 0.02 * jax.random.normal(k_ctx, (n_ctx, ctx_dim), dtype=jnp.float32)

    def ref_prompts(prefix, c, suffix):
        if c.ndim == 2:
            c = jnp.broadcast_to(c[None], (prefix.shape[0],) + c.shape)
        return jnp.concatenate([prefix, c.astype(prefix.dtype), suffix], axis=1)

    ref = ref_prompts(token_prefix, ctx, token_suffix)

    # 1) generic ctx, auto class blocking (collapses to a single grid step here)
    out = jax.block_until_ready(prompt_learner_forward(token_prefix, ctx, token_suffix))
    assert out.shape == (n_cls, seq_len, ctx_dim)
    assert jnp.array_equal(out, ref), "mismatch (generic ctx, auto block)"

    # 2) generic ctx, multi-step parallel grid (class_block=2 -> 4 grid steps)
    out2 = jax.block_until_ready(
        prompt_learner_forward(token_prefix, ctx, token_suffix, class_block=2))
    assert jnp.array_equal(out2, ref), "mismatch (generic ctx, class_block=2)"

    # 3) bf16 token embeddings with f32 ctx parameter (the real CLIP dtype mix)
    emb16 = embedding.astype(jnp.bfloat16)
    pre16, suf16 = emb16[:, :1, :], emb16[:, 1 + n_ctx:, :]
    ref16 = ref_prompts(pre16, ctx, suf16)
    out16 = jax.block_until_ready(prompt_learner_forward(pre16, ctx, suf16))
    assert out16.dtype == jnp.bfloat16
    assert jnp.array_equal(out16, ref16), "mismatch (bf16 prompts, f32 ctx)"

    # 4) class-specific contexts (cfg['csc'] = True)
    ctx_csc = 0.02 * jax.random.normal(k_csc, (n_cls, n_ctx, ctx_dim), dtype=jnp.float32)
    ref_csc = ref_prompts(token_prefix, ctx_csc, token_suffix)
    out_csc = jax.block_until_ready(
        prompt_learner_forward(token_prefix, ctx_csc, token_suffix))
    assert jnp.array_equal(out_csc, ref_csc), "mismatch (class-specific ctx)"

    # 5) aliased in-place variant: the full embedding already carries the
    #    prefix/suffix rows; only the n_ctx context rows are written.
    out_alias = jax.block_until_ready(prompt_learner_forward_inplace(embedding, ctx))
    assert out_alias.shape == (n_cls, seq_len, ctx_dim)
    assert jnp.array_equal(out_alias, ref), "mismatch (aliased in-place ctx write)"

    # 6) aliased in-place variant with class-specific ctx and multi-step grid
    out_alias_csc = jax.block_until_ready(
        prompt_learner_forward_inplace(embedding, ctx_csc, class_block=4))
    assert jnp.array_equal(out_alias_csc, ref_csc), "mismatch (in-place csc ctx)"

    print("KERNEL_OK")
</pallas_src>

<mosaic_0001>
module attributes {stable_mosaic.version = 11 : i64} {
  func.func @kernel(%arg0: i32, %arg1: memref<8x1x128xf32, #tpu.memory_space<vmem>>, %arg2: memref<4x128xf32, #tpu.memory_space<vmem>>, %arg3: memref<8x11x128xf32, #tpu.memory_space<vmem>>, %arg4: memref<8x16x128xf32, #tpu.memory_space<vmem>>) attributes {dimension_semantics = [#tpu.dimension_semantics<parallel>], iteration_bounds = array<i64: 1>, scalar_prefetch = 0 : i64, scratch_operands = 0 : i64, tpu.core_type = #tpu.core_type<tc>, window_params = [{transform_indices = @transform_0, window_bounds = array<i64: 8, 1, 128>}, {pipeline_mode = #tpu.pipeline_mode<synchronous>, transform_indices = @transform_1, window_bounds = array<i64: 4, 128>}, {transform_indices = @transform_2, window_bounds = array<i64: 8, 11, 128>}, {transform_indices = @transform_3, window_bounds = array<i64: 8, 16, 128>}]} {
    %c0 = arith.constant 0 : index
    %c0_0 = arith.constant 0 : index
    %0 = vector.load %arg2[%c0, %c0_0] : memref<4x128xf32, #tpu.memory_space<vmem>>, vector<4x128xf32>
    %1 = vector.shape_cast %0 : vector<4x128xf32> to vector<1x4x128xf32>
    %2 = vector.shape_cast %1 : vector<1x4x128xf32> to vector<1x4x128xf32>
    %3 = vector.broadcast %2 : vector<1x4x128xf32> to vector<8x4x128xf32>
    %c0_1 = arith.constant 0 : index
    %c0_2 = arith.constant 0 : index
    %c0_3 = arith.constant 0 : index
    %4 = vector.load %arg1[%c0_1, %c0_2, %c0_3] : memref<8x1x128xf32, #tpu.memory_space<vmem>>, vector<8x1x128xf32>
    %c0_4 = arith.constant 0 : index
    %c0_5 = arith.constant 0 : index
    %c0_6 = arith.constant 0 : index
    %5 = vector.load %arg3[%c0_4, %c0_5, %c0_6] : memref<8x11x128xf32, #tpu.memory_space<vmem>>, vector<8x11x128xf32>
    %6 = tpu.concatenate %4, %3, %5 in 1 : vector<8x1x128xf32>, vector<8x4x128xf32>, vector<8x11x128xf32> -> vector<8x16x128xf32>
    %c0_7 = arith.constant 0 : index
    %c0_8 = arith.constant 0 : index
    %c0_9 = arith.constant 0 : index
    %7 = vector.load %arg4[%c0_7, %c0_8, %c0_9] : memref<8x16x128xf32, #tpu.memory_space<vmem>>, vector<8x16x128xf32>
    tpu.vector_store %arg4[%c0_7, %c0_8, %c0_9], %6 {strides = array<i32>} : memref<8x16x128xf32, #tpu.memory_space<vmem>>, vector<8x16x128xf32>,
    return
  }
  func.func @transform_0(%arg0: i32) -> (i32, i32, i32) {
    %c0_i32 = arith.constant 0 : i32
    %c0_i32_0 = arith.constant 0 : i32
    %c0_i32_1 = arith.constant 0 : i32
    return %arg0, %c0_i32, %c0_i32_0 : i32, i32, i32
  }
  func.func @transform_1(%arg0: i32) -> (i32, i32) {
    %c0_i32 = arith.constant 0 : i32
    %c0_i32_0 = arith.constant 0 : i32
    %c0_i32_1 = arith.constant 0 : i32
    return %c0_i32, %c0_i32_0 : i32, i32
  }
  func.func @transform_2(%arg0: i32) -> (i32, i32, i32) {
    %c0_i32 = arith.constant 0 : i32
    %c0_i32_0 = arith.constant 0 : i32
    %c0_i32_1 = arith.constant 0 : i32
    return %arg0, %c0_i32, %c0_i32_0 : i32, i32, i32
  }
  func.func @transform_3(%arg0: i32) -> (i32, i32, i32) {
    %c0_i32 = arith.constant 0 : i32
    %c0_i32_0 = arith.constant 0 : i32
    %c0_i32_1 = arith.constant 0 : i32
    return %arg0, %c0_i32, %c0_i32_0 : i32, i32, i32
  }
}

</mosaic_0001>

<llo_original>
// kernel: tpu_custom_call.1
$region0: #{tpu_custom_call.1}
  #allocation0 [shape = 'u32[]', space=smem, size = 0x4, offset = 0x4, fixed_abs, tag = 'smem constant byte address 0x4 - core index']
  #allocation1 [shape = 'u32[72,128]{1,0:T(1,128)}', space=vmem, size = 0x9000, scoped, tag = 'internal scratch']
  %s0 = inlined_call_operand.vmem [shape: f32[8,1,128], index: 0, kind: input, shape index: {}]
  %s1 = inlined_call_operand.vmem [shape: f32[4,128], index: 1, kind: input, shape index: {}]
  %s2 = inlined_call_operand.vmem [shape: f32[8,11,128], index: 2, kind: input, shape index: {}]
  %s3 = inlined_call_operand.hbm [shape: f32[8,16,128], index: 3, kind: output, shape index: {}]
  %s4 = sld [smem:[#allocation0]]
  $region22: #{tpu_custom_call.1} parent=0
    _
  %s6 = ssub.s32 1, %s4
  %s7 = scalar_select 0, %s6, %s4
  $region1: #{tpu_custom_call.1} parent=0
    #allocation2 [shape = 'u8[65536]{0}', space=vmem, size = 0x10000, scoped, tag = 'output window, operand 0, single buffered']
    #allocation3 [shape = 's32[1]{0}', space=sflag, size = 0x4, scoped, tag = 'scoped memory for tpu_custom_call.1']
    %8 = vsyncpa [#allocation3], 0
    // Predicated region
    $region2: #{tpu_custom_call.1} parent=1 // pred_check
      _
    $region3: #{tpu_custom_call.1} parent=1 // pred_check_branch
      %10 = sbr.rel (0) target = $region5
    $region4: #{tpu_custom_call.1} parent=1 // pred_region
      _
    $region5: #{tpu_custom_call.1} parent=1 // pred_fallthru
      _
    // Predicated region
    $region6: #{tpu_custom_call.1} parent=1 // pred_check
      _
    $region7: #{tpu_custom_call.1} parent=1 // pred_check_branch
      %12 = sbr.rel (0) target = $region9
    $region8: #{tpu_custom_call.1} parent=1 // pred_region
      _
    $region9: #{tpu_custom_call.1} parent=1 // pred_fallthru
      _
    // Predicated region
    $region10: #{tpu_custom_call.1} parent=1 // pred_check
      _
    $region11: #{tpu_custom_call.1} parent=1 // pred_check_branch
      %14 = sbr.rel (0) target = $region13
    $region12: #{tpu_custom_call.1} parent=1 // pred_region
      _
    $region13: #{tpu_custom_call.1} parent=1 // pred_fallthru
      _
    %v15 = vld [vmem:[%s1] sm:$0xf]
    %v16 = vld [vmem:[%s0] sm:$0x1]
    %v17 = vld [vmem:[%s0 + $0x1] sm:$0x1]
    %v18 = vld [vmem:[%s0 + $0x2] sm:$0x1]
    %v19 = vld [vmem:[%s0 + $0x3] sm:$0x1]
    %v20 = vld [vmem:[%s0 + $0x4] sm:$0x1]
    %v21 = vld [vmem:[%s0 + $0x5] sm:$0x1]
    %v22 = vld [vmem:[%s0 + $0x6] sm:$0x1]
    %v23 = vld [vmem:[%s0 + $0x7] sm:$0x1]
    %v24 = vld [vmem:[%s2] sm:$0xff]
    %v25 = vld [vmem:[%s2 + $0x8] sm:$0x7]
    %v26 = vld [vmem:[%s2 + $0x10] sm:$0xff]
    %v27 = vld [vmem:[%s2 + $0x18] sm:$0x7]
    %v28 = vld [vmem:[%s2 + $0x20] sm:$0xff]
    %v29 = vld [vmem:[%s2 + $0x28] sm:$0x7]
    %v30 = vld [vmem:[%s2 + $0x30] sm:$0xff]
    %v31 = vld [vmem:[%s2 + $0x38] sm:$0x7]
    %v32 = vld [vmem:[%s2 + $0x40] sm:$0xff]
    %v33 = vld [vmem:[%s2 + $0x48] sm:$0x7]
    %v34 = vld [vmem:[%s2 + $0x50] sm:$0xff]
    %v35 = vld [vmem:[%s2 + $0x58] sm:$0x7]
    %v36 = vld [vmem:[%s2 + $0x60] sm:$0xff]
    %v37 = vld [vmem:[%s2 + $0x68] sm:$0x7]
    %v38 = vld [vmem:[%s2 + $0x70] sm:$0xff]
    %v39 = vld [vmem:[%s2 + $0x78] sm:$0x7]
    %v41 = vrot.slane %v15, 7
    %vm59 = vcmask 1044480
    %v60 = vrot.slane %v24, 3
    %v61 = vrot.slane %v25, 3
    %v62 = vsel %vm59, %v60, %v61
    %v63 = vrot.slane %v26, 3
    %v64 = vrot.slane %v27, 3
    %v65 = vsel %vm59, %v63, %v64
    %v66 = vrot.slane %v28, 3
    %v67 = vrot.slane %v29, 3
    %v68 = vsel %vm59, %v66, %v67
    %v69 = vrot.slane %v30, 3
    %v70 = vrot.slane %v31, 3
    %v71 = vsel %vm59, %v69, %v70
    %v72 = vrot.slane %v32, 3
    %v73 = vrot.slane %v33, 3
    %v74 = vsel %vm59, %v72, %v73
    %v75 = vrot.slane %v34, 3
    %v76 = vrot.slane %v35, 3
    %v77 = vsel %vm59, %v75, %v76
    %v78 = vrot.slane %v36, 3
    %v79 = vrot.slane %v37, 3
    %v80 = vsel %vm59, %v78, %v79
    %v81 = vrot.slane %v38, 3
    %v82 = vrot.slane %v39, 3
    %v83 = vsel %vm59, %v81, %v82
    %vm100 = vcmask 1040384
    %v101 = vsel %vm100, %v16, %v41
    %v102 = vsel %vm100, %v17, %v41
    %v103 = vsel %vm100, %v18, %v41
    %v104 = vsel %vm100, %v19, %v41
    %v105 = vsel %vm100, %v20, %v41
    %v106 = vsel %vm100, %v21, %v41
    %v107 = vsel %vm100, %v22, %v41
    %v108 = vsel %vm100, %v23, %v41
    %v109 = vsel %vm59, %v101, %v60
    %v110 = vsel %vm59, %v102, %v63
    %v111 = vsel %vm59, %v103, %v66
    %v112 = vsel %vm59, %v104, %v69
    %v113 = vsel %vm59, %v105, %v72
    %v114 = vsel %vm59, %v106, %v75
    %v115 = vsel %vm59, %v107, %v78
    %v116 = vsel %vm59, %v108, %v81
    %117 = vst [vmem:[#allocation2] sm:$0xff] %v109
    %118 = vst [vmem:[#allocation2 + $0x8] sm:$0xff] %v62
    %119 = vst [vmem:[#allocation2 + $0x10] sm:$0xff] %v110
    %120 = vst [vmem:[#allocation2 + $0x18] sm:$0xff] %v65
    %121 = vst [vmem:[#allocation2 + $0x20] sm:$0xff] %v111
    %122 = vst [vmem:[#allocation2 + $0x28] sm:$0xff] %v68
    %123 = vst [vmem:[#allocation2 + $0x30] sm:$0xff] %v112
    %124 = vst [vmem:[#allocation2 + $0x38] sm:$0xff] %v71
    %125 = vst [vmem:[#allocation2 + $0x40] sm:$0xff] %v113
    %126 = vst [vmem:[#allocation2 + $0x48] sm:$0xff] %v74
    %127 = vst [vmem:[#allocation2 + $0x50] sm:$0xff] %v114
    %128 = vst [vmem:[#allocation2 + $0x58] sm:$0xff] %v77
    %129 = vst [vmem:[#allocation2 + $0x60] sm:$0xff] %v115
    %130 = vst [vmem:[#allocation2 + $0x68] sm:$0xff] %v80
    %131 = vst [vmem:[#allocation2 + $0x70] sm:$0xff] %v116
    %132 = vst [vmem:[#allocation2 + $0x78] sm:$0xff] %v83
    // Predicated region
    $region14: #{tpu_custom_call.1} parent=1 // pred_check
      _
    $region15: #{tpu_custom_call.1} parent=1 // pred_check_branch
      %134 = sbr.rel (0) target = $region17
    $region16: #{tpu_custom_call.1} parent=1 // pred_region
      %136 = vsyncadd [#allocation3], 0
      %s137 = sshll.u32 [#allocation2], 4
      %s138 = int_to_ptr.vmem [resolvable:$true] %s137
      %s139 = sshll.u32 %s3, 4
      %s140 = int_to_ptr.hbm [resolvable:$true] %s139
      %145 = dma.vmem_to_hbm [thread:$0]  %s138, 2048, %s140, [#allocation3], 128, 128, 8
    $region17: #{tpu_custom_call.1} parent=1 // pred_fallthru
      _
    // Predicated region
    $region18: #{tpu_custom_call.1} parent=1 // pred_check
      _
    $region19: #{tpu_custom_call.1} parent=1 // pred_check_branch
      %147 = sbr.rel (0) target = $region21
    $region20: #{tpu_custom_call.1} parent=1 // pred_region
      %149 = dma.done [#allocation3], 2048
    $region21: #{tpu_custom_call.1} parent=1 // pred_fallthru
      _
    %150 = vsyncpa [#allocation3], 1

</llo_original>
